<compile_context>
chip_gen: v7x
topology: tpu7x:2x2x1
jax: 0.10.0
libtpu: 0.0.40
codegen_flags: <defaults>
</compile_context>

<pallas_src>
import functools

import jax
import jax.numpy as jnp
from jax.experimental import pallas as pl
from jax.experimental.pallas import tpu as pltpu


_LANE = 128
_SUBLANE = 8                  # f32 sublane count (accumulators are f32)
_MAX_TILE_BYTES = 4 << 20     # ~4 MiB per input per pipeline buffer
_VMEM_LIMIT_BYTES = 32 << 20  # raises v5e's 16 MiB scoped default; no-op elsewhere


def _sublane_multiple(dtype) -> int:
    itemsize = jnp.dtype(dtype).itemsize
    return max(8, 32 // max(itemsize, 1))


def _round_up(x: int, m: int) -> int:
    return ((x + m - 1) // m) * m


def _dice_from_sums(intersection, union, smooth):
    dice_score = (2.0 * intersection + smooth) / (union + smooth)
    return 1.0 - jnp.mean(dice_score)


def _dice_partial_kernel(p_ref, t_ref, inter_ref, union_ref, *,
                         tile_r, tiles_per_split, rows_valid, mask_needed):
    """Accumulate (8,128) partial sums of (p*t) and (p+t) for one batch row.

    p_ref, t_ref: (tile_r, 128) feature tiles.
    inter_ref, union_ref: (8, 128) f32 accumulators, resident across the
    trailing "arbitrary" grid axis.
    """
    s = pl.program_id(0)   # megacore row-split chunk
    ri = pl.program_id(2)  # reduction step within the chunk

    @pl.when(ri == 0)
    def _init():
        inter_ref[...] = jnp.zeros_like(inter_ref)
        union_ref[...] = jnp.zeros_like(union_ref)

    # Upcast after load: HBM traffic stays at native width, accumulate in f32
    # (also works on v5e which lacks bf16 VPU math).
    p = p_ref[...].astype(jnp.float32)
    t = t_ref[...].astype(jnp.float32)

    if mask_needed:
        # Ragged last tile (and any clamped duplicate tile): Pallas does not
        # zero out-of-range rows of a partial block, so mask them explicitly.
        row0 = (s * tiles_per_split + ri) * tile_r
        row_idx = jax.lax.broadcasted_iota(jnp.int32, (tile_r, _LANE), 0) + row0
        keep = row_idx < rows_valid
        p = jnp.where(keep, p, 0.0)
        t = jnp.where(keep, t, 0.0)

    # Fold the tile into one (8,128) vreg with pure vreg-wise adds (no XLU).
    k = tile_r // _SUBLANE
    inter_ref[...] += jnp.sum((p * t).reshape(k, _SUBLANE, _LANE), axis=0)
    union_ref[...] += jnp.sum((p + t).reshape(k, _SUBLANE, _LANE), axis=0)


def dice_loss_v0(pred, target, smooth=1e-05, *, force_pallas=False,
                 max_tile_rows=None):
    """DICELossV0.forward: 1 - mean_b[(2*sum(p*t) + s) / (sum(p)+sum(t) + s)]."""
    assert pred.shape == target.shape
    b = pred.shape[0]
    pred2 = pred.reshape(b, -1)
    target2 = target.reshape(b, -1)
    n = pred2.shape[1]

    sub = max(_sublane_multiple(pred2.dtype), _sublane_multiple(target2.dtype))
    rows = pl.cdiv(n, _LANE)
    rows_p = _round_up(rows, sub)  # pad only to the sublane multiple, never tile_r

    # Fast path: for tiny per-batch feature counts the fixed pallas_call /
    # pipeline setup dominates; plain XLA fusion is faster and needs no
    # pad/reshape plumbing.
    if not force_pallas and rows_p <= 2 * sub:
        p = pred2.astype(jnp.float32)
        t = target2.astype(jnp.float32)
        intersection = jnp.sum(p * t, axis=1)
        union = jnp.sum(p, axis=1) + jnp.sum(t, axis=1)
        return _dice_from_sums(intersection, union, smooth)

    n_pad = rows_p * _LANE

    def _prep(x):
        # Tiny zero pad (< sub*128 elements per batch row) just to make the
        # (rows_p, 128) view; zeros do not change intersection or union.
        if n_pad != n:
            x = jnp.pad(x, ((0, 0), (0, n_pad - n)))
        return x.reshape(b, rows_p, _LANE)

    p3 = _prep(pred2)
    t3 = _prep(target2)

    # Tile sizing: ~4 MiB per input per buffer; double-buffered footprint
    # ~16 MiB (f32/f32), comfortable on v7x's smaller VMEM and covered by the
    # 32 MiB limit on v5e.
    max_itemsize = max(jnp.dtype(p3.dtype).itemsize, jnp.dtype(t3.dtype).itemsize)
    cap = _MAX_TILE_BYTES // (_LANE * max_itemsize)
    if max_tile_rows is not None:
        cap = min(cap, max_tile_rows)
    tile_r = max(sub, (min(cap, rows_p) // sub) * sub)
    num_r = pl.cdiv(rows_p, tile_r)

    # Megacore: if the batch axis alone cannot feed two TensorCores (v7x),
    # split the row axis into two parallel chunks.
    split = 2 if (b == 1 and num_r >= 2) else 1
    tiles_per_split = pl.cdiv(num_r, split)
    need_clamp = split * tiles_per_split > num_r
    mask_needed = split * tiles_per_split * tile_r != rows_p

    def _row_block(s, ri):
        gt = s * tiles_per_split + ri
        if need_clamp:
            # Duplicate trailing block: re-reads a valid tile, contribution is
            # masked to zero in the kernel (its unclamped row0 >= rows_p).
            gt = jnp.minimum(gt, num_r - 1)
        return gt

    in_index = lambda s, bi, ri: (bi, _row_block(s, ri), 0)
    out_index = lambda s, bi, ri: (s, bi, 0, 0)

    in_bytes = b * n_pad * (jnp.dtype(p3.dtype).itemsize
                            + jnp.dtype(t3.dtype).itemsize)
    out_bytes = 2 * split * b * _SUBLANE * _LANE * 4
    cost = pl.CostEstimate(flops=3 * b * n_pad, transcendentals=0,
                           bytes_accessed=in_bytes + out_bytes)

    kernel = functools.partial(
        _dice_partial_kernel, tile_r=tile_r, tiles_per_split=tiles_per_split,
        rows_valid=rows_p, mask_needed=mask_needed)

    inter_part, union_part = pl.pallas_call(
        kernel,
        out_shape=(
            jax.ShapeDtypeStruct((split, b, _SUBLANE, _LANE), jnp.float32),
            jax.ShapeDtypeStruct((split, b, _SUBLANE, _LANE), jnp.float32),
        ),
        grid_spec=pltpu.PrefetchScalarGridSpec(
            num_scalar_prefetch=0,
            grid=(split, b, tiles_per_split),
            in_specs=[
                pl.BlockSpec((None, tile_r, _LANE), in_index),
                pl.BlockSpec((None, tile_r, _LANE), in_index),
            ],
            out_specs=(
                pl.BlockSpec((None, None, _SUBLANE, _LANE), out_index),
                pl.BlockSpec((None, None, _SUBLANE, _LANE), out_index),
            ),
        ),
        compiler_params=pltpu.CompilerParams(
            dimension_semantics=("parallel", "parallel", "arbitrary"),
            vmem_limit_bytes=_VMEM_LIMIT_BYTES,
        ),
        cost_estimate=cost,
    )(p3, t3)

    # Tiny final reductions + dice combination in plain JAX.
    intersection = jnp.sum(inter_part, axis=(0, 2, 3))   # (B,)
    union = jnp.sum(union_part, axis=(0, 2, 3))          # (B,)
    return _dice_from_sums(intersection, union, smooth)


def _reference_dice_loss(pred, target, smooth=1e-05):
    b = pred.shape[0]
    p = pred.reshape(b, -1).astype(jnp.float32)
    t = target.reshape(b, -1).astype(jnp.float32)
    inter = jnp.sum(p * t, axis=1)
    union = jnp.sum(p, axis=1) + jnp.sum(t, axis=1)
    dice = (2.0 * inter + smooth) / (union + smooth)
    return 1.0 - jnp.mean(dice)


if __name__ == "__main__":
    key = jax.random.PRNGKey(0)
    ks = jax.random.split(key, 6)

    def _check(loss, pred, target, name, atol=1e-4, rtol=1e-4):
        ref = _reference_dice_loss(pred, target)
        assert jnp.allclose(loss, ref, atol=atol, rtol=rtol), (name, loss, ref)

    # Case A: module-sized input (B, C, H, W) = (2, 4, 16, 16); tiny -> fast path.
    pred_a = jax.nn.sigmoid(jax.random.normal(ks[0], (2, 4, 16, 16), jnp.float32))
    targ_a = (jax.random.uniform(ks[1], (2, 4, 16, 16)) > 0.5).astype(jnp.float32)
    loss_a = jax.block_until_ready(dice_loss_v0(pred_a, targ_a))
    _check(loss_a, pred_a, targ_a, "fast_path")

    # Case B: same input forced through the Pallas kernel (aligned, no mask).
    loss_b = jax.block_until_ready(dice_loss_v0(pred_a, targ_a, force_pallas=True))
    _check(loss_b, pred_a, targ_a, "pallas_small")

    # Case C: B == 1 -> megacore row split + ragged last tile masking.
    pred_c = jax.nn.sigmoid(jax.random.normal(ks[2], (1, 4, 48, 80), jnp.float32))
    targ_c = (jax.random.uniform(ks[3], (1, 4, 48, 80)) > 0.5).astype(jnp.float32)
    loss_c = jax.block_until_ready(dice_loss_v0(pred_c, targ_c, max_tile_rows=32))
    _check(loss_c, pred_c, targ_c, "pallas_split_masked")

    # Case D: mixed dtypes (bf16 pred / f32 target), non-lane-aligned n, odd
    # tile count -> exercises small pad, clamped duplicate block, upcast path.
    pred_d = jax.nn.sigmoid(
        jax.random.normal(ks[4], (1, 3, 40, 72), jnp.float32)).astype(jnp.bfloat16)
    targ_d = (jax.random.uniform(ks[5], (1, 3, 40, 72)) > 0.5).astype(jnp.float32)
    loss_d = jax.block_until_ready(dice_loss_v0(pred_d, targ_d, max_tile_rows=32))
    _check(loss_d, pred_d, targ_d, "pallas_mixed_dtype", atol=2e-3, rtol=2e-3)

    print("KERNEL_OK")
</pallas_src>

<mosaic_0001>
module attributes {stable_mosaic.version = 11 : i64} {
  func.func @_dice_partial_kernel(%arg0: i32, %arg1: i32, %arg2: i32, %arg3: memref<1x8x128xf32, #tpu.memory_space<vmem>>, %arg4: memref<1x8x128xf32, #tpu.memory_space<vmem>>, %arg5: memref<1x1x8x128xf32, #tpu.memory_space<vmem>>, %arg6: memref<1x1x8x128xf32, #tpu.memory_space<vmem>>) attributes {dimension_semantics = [#tpu.dimension_semantics<parallel>, #tpu.dimension_semantics<parallel>, #tpu.dimension_semantics<arbitrary>], iteration_bounds = array<i64: 1, 2, 1>, scalar_prefetch = 0 : i64, scratch_operands = 0 : i64, tpu.core_type = #tpu.core_type<tc>, window_params = [{transform_indices = @transform_0, window_bounds = array<i64: 1, 8, 128>}, {transform_indices = @transform_1, window_bounds = array<i64: 1, 8, 128>}, {transform_indices = @transform_2, window_bounds = array<i64: 1, 1, 8, 128>}, {transform_indices = @transform_3, window_bounds = array<i64: 1, 1, 8, 128>}]} {
    %c0_i32 = arith.constant 0 : i32
    %0 = arith.cmpi eq, %arg2, %c0_i32 : i32
    %1 = arith.extui %0 : i1 to i32
    %c0_i32_0 = arith.constant 0 : i32
    %2 = arith.cmpi ne, %1, %c0_i32_0 : i32
    scf.if %2 {
      %cst_23 = arith.constant 0.000000e+00 : f32
      %25 = vector.broadcast %cst_23 : f32 to vector<8x128xf32>
      %c0_24 = arith.constant 0 : index
      %c0_25 = arith.constant 0 : index
      %c0_26 = arith.constant 0 : index
      %c0_27 = arith.constant 0 : index
      %26 = vector.load %arg5[%c0_24, %c0_25, %c0_26, %c0_27] : memref<1x1x8x128xf32, #tpu.memory_space<vmem>>, vector<1x1x8x128xf32>
      %27 = vector.shape_cast %26 : vector<1x1x8x128xf32> to vector<8x128xf32>
      %28 = vector.shape_cast %25 : vector<8x128xf32> to vector<1x1x8x128xf32>
      tpu.vector_store %arg5[%c0_24, %c0_25, %c0_26, %c0_27], %28 {strides = array<i32>} : memref<1x1x8x128xf32, #tpu.memory_space<vmem>>, vector<1x1x8x128xf32>,
      %cst_28 = arith.constant 0.000000e+00 : f32
      %29 = vector.broadcast %cst_28 : f32 to vector<8x128xf32>
      %c0_29 = arith.constant 0 : index
      %c0_30 = arith.constant 0 : index
      %c0_31 = arith.constant 0 : index
      %c0_32 = arith.constant 0 : index
      %30 = vector.load %arg6[%c0_29, %c0_30, %c0_31, %c0_32] : memref<1x1x8x128xf32, #tpu.memory_space<vmem>>, vector<1x1x8x128xf32>
      %31 = vector.shape_cast %30 : vector<1x1x8x128xf32> to vector<8x128xf32>
      %32 = vector.shape_cast %29 : vector<8x128xf32> to vector<1x1x8x128xf32>
      tpu.vector_store %arg6[%c0_29, %c0_30, %c0_31, %c0_32], %32 {strides = array<i32>} : memref<1x1x8x128xf32, #tpu.memory_space<vmem>>, vector<1x1x8x128xf32>,
    } else {
    }
    %c0 = arith.constant 0 : index
    %c0_1 = arith.constant 0 : index
    %c0_2 = arith.constant 0 : index
    %3 = vector.load %arg3[%c0, %c0_1, %c0_2] : memref<1x8x128xf32, #tpu.memory_space<vmem>>, vector<1x8x128xf32>
    %4 = vector.shape_cast %3 : vector<1x8x128xf32> to vector<8x128xf32>
    %c0_3 = arith.constant 0 : index
    %c0_4 = arith.constant 0 : index
    %c0_5 = arith.constant 0 : index
    %5 = vector.load %arg4[%c0_3, %c0_4, %c0_5] : memref<1x8x128xf32, #tpu.memory_space<vmem>>, vector<1x8x128xf32>
    %6 = vector.shape_cast %5 : vector<1x8x128xf32> to vector<8x128xf32>
    %c0_6 = arith.constant 0 : index
    %c0_7 = arith.constant 0 : index
    %c0_8 = arith.constant 0 : index
    %c0_9 = arith.constant 0 : index
    %7 = vector.load %arg5[%c0_6, %c0_7, %c0_8, %c0_9] : memref<1x1x8x128xf32, #tpu.memory_space<vmem>>, vector<1x1x8x128xf32>
    %8 = vector.shape_cast %7 : vector<1x1x8x128xf32> to vector<8x128xf32>
    %9 = arith.mulf %4, %6 : vector<8x128xf32>
    %10 = vector.shape_cast %9 : vector<8x128xf32> to vector<1x8x128xf32>
    %cst = arith.constant dense<0.000000e+00> : vector<8x128xf32>
    %11 = vector.multi_reduction <add>, %10, %cst [0] : vector<1x8x128xf32> to vector<8x128xf32>
    %12 = arith.addf %8, %11 : vector<8x128xf32>
    %c0_10 = arith.constant 0 : index
    %c0_11 = arith.constant 0 : index
    %c0_12 = arith.constant 0 : index
    %c0_13 = arith.constant 0 : index
    %13 = vector.load %arg5[%c0_10, %c0_11, %c0_12, %c0_13] : memref<1x1x8x128xf32, #tpu.memory_space<vmem>>, vector<1x1x8x128xf32>
    %14 = vector.shape_cast %13 : vector<1x1x8x128xf32> to vector<8x128xf32>
    %15 = vector.shape_cast %12 : vector<8x128xf32> to vector<1x1x8x128xf32>
    tpu.vector_store %arg5[%c0_10, %c0_11, %c0_12, %c0_13], %15 {strides = array<i32>} : memref<1x1x8x128xf32, #tpu.memory_space<vmem>>, vector<1x1x8x128xf32>,
    %c0_14 = arith.constant 0 : index
    %c0_15 = arith.constant 0 : index
    %c0_16 = arith.constant 0 : index
    %c0_17 = arith.constant 0 : index
    %16 = vector.load %arg6[%c0_14, %c0_15, %c0_16, %c0_17] : memref<1x1x8x128xf32, #tpu.memory_space<vmem>>, vector<1x1x8x128xf32>
    %17 = vector.shape_cast %16 : vector<1x1x8x128xf32> to vector<8x128xf32>
    %18 = arith.addf %4, %6 : vector<8x128xf32>
    %19 = vector.shape_cast %18 : vector<8x128xf32> to vector<1x8x128xf32>
    %cst_18 = arith.constant dense<0.000000e+00> : vector<8x128xf32>
    %20 = vector.multi_reduction <add>, %19, %cst_18 [0] : vector<1x8x128xf32> to vector<8x128xf32>
    %21 = arith.addf %17, %20 : vector<8x128xf32>
    %c0_19 = arith.constant 0 : index
    %c0_20 = arith.constant 0 : index
    %c0_21 = arith.constant 0 : index
    %c0_22 = arith.constant 0 : index
    %22 = vector.load %arg6[%c0_19, %c0_20, %c0_21, %c0_22] : memref<1x1x8x128xf32, #tpu.memory_space<vmem>>, vector<1x1x8x128xf32>
    %23 = vector.shape_cast %22 : vector<1x1x8x128xf32> to vector<8x128xf32>
    %24 = vector.shape_cast %21 : vector<8x128xf32> to vector<1x1x8x128xf32>
    tpu.vector_store %arg6[%c0_19, %c0_20, %c0_21, %c0_22], %24 {strides = array<i32>} : memref<1x1x8x128xf32, #tpu.memory_space<vmem>>, vector<1x1x8x128xf32>,
    return
  }
  func.func @transform_0(%arg0: i32, %arg1: i32, %arg2: i32) -> (i32, i32, i32) {
    %c1_i32 = arith.constant 1 : i32
    %0 = arith.muli %arg0, %c1_i32 : i32
    %1 = arith.addi %0, %arg2 : i32
    %c0_i32 = arith.constant 0 : i32
    %c0_i32_0 = arith.constant 0 : i32
    return %arg1, %1, %c0_i32 : i32, i32, i32
  }
  func.func @transform_1(%arg0: i32, %arg1: i32, %arg2: i32) -> (i32, i32, i32) {
    %c1_i32 = arith.constant 1 : i32
    %0 = arith.muli %arg0, %c1_i32 : i32
    %1 = arith.addi %0, %arg2 : i32
    %c0_i32 = arith.constant 0 : i32
    %c0_i32_0 = arith.constant 0 : i32
    return %arg1, %1, %c0_i32 : i32, i32, i32
  }
  func.func @transform_2(%arg0: i32, %arg1: i32, %arg2: i32) -> (i32, i32, i32, i32) {
    %c0_i32 = arith.constant 0 : i32
    %c0_i32_0 = arith.constant 0 : i32
    %c0_i32_1 = arith.constant 0 : i32
    return %arg0, %arg1, %c0_i32, %c0_i32_0 : i32, i32, i32, i32
  }
  func.func @transform_3(%arg0: i32, %arg1: i32, %arg2: i32) -> (i32, i32, i32, i32) {
    %c0_i32 = arith.constant 0 : i32
    %c0_i32_0 = arith.constant 0 : i32
    %c0_i32_1 = arith.constant 0 : i32
    return %arg0, %arg1, %c0_i32, %c0_i32_0 : i32, i32, i32, i32
  }
}

</mosaic_0001>

<llo_original>
// kernel: tpu_custom_call.1
$region0: #{tpu_custom_call.1}
  #allocation0 [shape = 'u32[]', space=smem, size = 0x4, offset = 0x4, fixed_abs, tag = 'smem constant byte address 0x4 - core index']
  #allocation1 [shape = 'u32[144,128]{1,0:T(1,128)}', space=vmem, size = 0x12000, scoped, tag = 'internal scratch']
  %s0 = inlined_call_operand.hbm [shape: f32[2,8,128], index: 0, kind: input, shape index: {}]
  %s1 = inlined_call_operand.hbm [shape: f32[2,8,128], index: 1, kind: input, shape index: {}]
  %s2 = inlined_call_operand.hbm [shape: f32[1,2,8,128], index: 2, kind: output, shape index: {0}]
  %s3 = inlined_call_operand.hbm [shape: f32[1,2,8,128], index: 3, kind: output, shape index: {1}]
  %4 = xla_tuple %s2, %s3
  %s5 = sld [smem:[#allocation0]]
  $region61: #{tpu_custom_call.1} parent=0
    _
  %s7 = ssub.s32 1, %s5
  %s8 = scalar_select 0, %s7, %s5
  $region1: #{tpu_custom_call.1} parent=0
    #allocation2 [shape = 'u8[8192]{0}', space=vmem, size = 0x2000, scoped, tag = 'input window, operand 0']
    #allocation3 [shape = 's32[2]{0}', space=sflag, size = 0x8, scoped, tag = 'scoped memory for tpu_custom_call.1']
    #allocation4 [shape = 's32[2]{0}', space=sflag, size = 0x8, scoped, tag = 'scoped memory for tpu_custom_call.1']
    #allocation5 [shape = 'u8[8192]{0}', space=vmem, size = 0x2000, scoped, tag = 'input window, operand 1']
    #allocation6 [shape = 's32[2]{0}', space=sflag, size = 0x8, scoped, tag = 'scoped memory for tpu_custom_call.1']
    #allocation7 [shape = 'u8[8192]{0}', space=vmem, size = 0x2000, scoped, tag = 'output window, operand 0']
    #allocation8 [shape = 'u8[8192]{0}', space=vmem, size = 0x2000, scoped, tag = 'output window, operand 1']
    #allocation9 [shape = 's32[2]{0}', space=sflag, size = 0x8, scoped, tag = 'scoped memory for tpu_custom_call.1']
    %9 = vsyncpa [#allocation3], 0
    %s10 = scalar_lea.sflag [#allocation3], 1
    %11 = vsyncpa %s10, 0
    %12 = vsyncpa [#allocation6], 0
    %s13 = scalar_lea.sflag [#allocation6], 1
    %14 = vsyncpa %s13, 0
    %15 = vsyncpa [#allocation4], 0
    %s16 = scalar_lea.sflag [#allocation4], 1
    %17 = vsyncpa %s16, 0
    %18 = vsyncpa [#allocation9], 0
    %s19 = scalar_lea.sflag [#allocation9], 1
    %20 = vsyncpa %s19, 0
    loop: start=0, step=1, limit=4
    $region2: #{tpu_custom_call.1} parent=1 // loop_pre_header
      _
    $region3: #{tpu_custom_call.1} parent=1 // loop_header
      %s22 = sphi 0, %s26
      %p23 = scmp.ge.s32.totalorder %s22, 4
      %s29 = sphi 0, %s48
      %s30 = sphi 0, %s44
      %s31 = sphi 0, %s40
      %s32 = sphi 0, %s29
      %s33 = sphi 0, %s30
      %s34 = sphi 0, %s31
      %s35 = sphi 0, %s32
      %s36 = sphi 0, %s33
      %s37 = sphi 0, %s34
      %s55 = sphi 0, %s57
      %s58 = sphi 0, %s55
      %s59 = sphi 0, %s58
      %s75 = sphi 0, %s59
      %s85 = sphi 0, %s87
      %s88 = sphi 0, %s85
      %s89 = sphi 0, %s88
      %s105 = sphi 0, %s89
      %s113 = sphi 0, %s115
      %s116 = sphi 0, %s113
      %s117 = sphi 0, %s116
      %s133 = sphi 0, %s117
      %s141 = sphi 0, %s143
      %s144 = sphi 0, %s141
      %s145 = sphi 0, %s144
      %s161 = sphi 0, %s145
    $region4: #{tpu_custom_call.1} parent=1 // loop_header_branch
      %25 = sbr.rel (%p23) target = $region8
    $region5: #{tpu_custom_call.1} parent=1 // loop_body
      %s27 = ssub.s32 %s22, 1
      %s28 = ssub.s32 %s22, 2
      %s38 = sadd.s32 1, %s31
      %p39 = scmp.ge.s32.totalorder %s38, 1
      %s40 = scalar_select %p39, 0, %s38
      %s41 = sadd.s32 1, %s30
      %s42 = scalar_select %p39, %s41, %s30
      %p43 = scmp.ge.s32.totalorder %s42, 2
      %s44 = scalar_select %p43, 0, %s42
      %s45 = sadd.s32 1, %s29
      %s46 = scalar_select %p43, %s45, %s29
      %p47 = scmp.ge.s32.totalorder %s46, 1
      %s48 = scalar_select %p47, 0, %s46
      %s49 = sadd.s32 %s29, %s31
      %s50 = sadd.s32 %s48, %s40
      %s51 = ssub.s32 %s30, %s44
      %s52 = ssub.s32 %s49, %s50
      %s53 = sor.u32 %s51, %s52
      %p54 = scmp.eq.s32.totalorder %s53, 0
      %s56 = sadd.s32 %s55, 1
      %s57 = scalar_select %p54, %s55, %s56
      %p60 = pneg %p54
      %p61 = scmp.eq.s32.totalorder %s22, 1
      %p62 = por %p60, %p61
      %p63 = scmp.ne.s32.totalorder %s55, %s58
      %p64 = scmp.eq.s32.totalorder %s22, 0
      %p65 = por %p63, %p64
      %p66 = scmp.ne.s32.totalorder %s55, %s58
      %p67 = scmp.eq.s32.totalorder %s27, 1
      %p68 = por %p66, %p67
      %p69 = scmp.ne.s32.totalorder %s58, %s59
      %p70 = scmp.eq.s32.totalorder %s27, 0
      %p71 = por %p69, %p70
      %p72 = scmp.ne.s32.totalorder %s58, %s59
      %p73 = scmp.eq.s32.totalorder %s28, 1
      %p74 = por %p72, %p73
      %p76 = scmp.ne.s32.totalorder %s59, %s75
      %p77 = scmp.eq.s32.totalorder %s28, 0
      %p78 = por %p76, %p77
      %s79 = sadd.s32 %s29, %s31
      %s80 = sadd.s32 %s48, %s40
      %s81 = ssub.s32 %s30, %s44
      %s82 = ssub.s32 %s79, %s80
      %s83 = sor.u32 %s81, %s82
      %p84 = scmp.eq.s32.totalorder %s83, 0
      %s86 = sadd.s32 %s85, 1
      %s87 = scalar_select %p84, %s85, %s86
      %p90 = pneg %p84
      %p91 = scmp.eq.s32.totalorder %s22, 1
      %p92 = por %p90, %p91
      %p93 = scmp.ne.s32.totalorder %s85, %s88
      %p94 = scmp.eq.s32.totalorder %s22, 0
      %p95 = por %p93, %p94
      %p96 = scmp.ne.s32.totalorder %s85, %s88
      %p97 = scmp.eq.s32.totalorder %s27, 1
      %p98 = por %p96, %p97
      %p99 = scmp.ne.s32.totalorder %s88, %s89
      %p100 = scmp.eq.s32.totalorder %s27, 0
      %p101 = por %p99, %p100
      %p102 = scmp.ne.s32.totalorder %s88, %s89
      %p103 = scmp.eq.s32.totalorder %s28, 1
      %p104 = por %p102, %p103
      %p106 = scmp.ne.s32.totalorder %s89, %s105
      %p107 = scmp.eq.s32.totalorder %s28, 0
      %p108 = por %p106, %p107
      %s109 = ssub.s32 %s29, %s48
      %s110 = ssub.s32 %s30, %s44
      %s111 = sor.u32 %s109, %s110
      %p112 = scmp.eq.s32.totalorder %s111, 0
      %s114 = sadd.s32 %s113, 1
      %s115 = scalar_select %p112, %s113, %s114
      %p118 = pneg %p112
      %p119 = scmp.eq.s32.totalorder %s22, 1
      %p120 = por %p118, %p119
      %p121 = scmp.ne.s32.totalorder %s113, %s116
      %p122 = scmp.eq.s32.totalorder %s22, 0
      %p123 = por %p121, %p122
      %p124 = scmp.ne.s32.totalorder %s113, %s116
      %p125 = scmp.eq.s32.totalorder %s27, 1
      %p126 = por %p124, %p125
      %p127 = scmp.ne.s32.totalorder %s116, %s117
      %p128 = scmp.eq.s32.totalorder %s27, 0
      %p129 = por %p127, %p128
      %p130 = scmp.ne.s32.totalorder %s116, %s117
      %p131 = scmp.eq.s32.totalorder %s28, 1
      %p132 = por %p130, %p131
      %p134 = scmp.ne.s32.totalorder %s117, %s133
      %p135 = scmp.eq.s32.totalorder %s28, 0
      %p136 = por %p134, %p135
      %s137 = ssub.s32 %s29, %s48
      %s138 = ssub.s32 %s30, %s44
      %s139 = sor.u32 %s137, %s138
      %p140 = scmp.eq.s32.totalorder %s139, 0
      %s142 = sadd.s32 %s141, 1
      %s143 = scalar_select %p140, %s141, %s142
      %p146 = pneg %p140
      %p147 = scmp.eq.s32.totalorder %s22, 1
      %p148 = por %p146, %p147
      %p149 = scmp.ne.s32.totalorder %s141, %s144
      %p150 = scmp.eq.s32.totalorder %s22, 0
      %p151 = por %p149, %p150
      %p152 = scmp.ne.s32.totalorder %s141, %s144
      %p153 = scmp.eq.s32.totalorder %s27, 1
      %p154 = por %p152, %p153
      %p155 = scmp.ne.s32.totalorder %s144, %s145
      %p156 = scmp.eq.s32.totalorder %s27, 0
      %p157 = por %p155, %p156
      %p158 = scmp.ne.s32.totalorder %s144, %s145
      %p159 = scmp.eq.s32.totalorder %s28, 1
      %p160 = por %p158, %p159
      %p162 = scmp.ne.s32.totalorder %s145, %s161
      %p163 = scmp.eq.s32.totalorder %s28, 0
      %p164 = por %p162, %p163
      %p165 = scmp.le.s32.totalorder 1, %s22
      %p166 = scmp.lt.s32.totalorder %s22, 3
      %p167 = pnand %p165, %p166
      %p168 = pneg %p167
      // Predicated region
      $region9: #{tpu_custom_call.1} parent=5 // pred_check
        _
      $region10: #{tpu_custom_call.1} parent=5 // pred_check_branch
        %170 = sbr.rel (%p167) target = $region12
      $region11: #{tpu_custom_call.1} parent=5 // pred_region
        %s171 = ssub.s32 %s22, 1
      $region12: #{tpu_custom_call.1} parent=5 // pred_fallthru
        _
      %p172 = scmp.lt.s32.totalorder %s22, 2
      // Predicated region
      $region13: #{tpu_custom_call.1} parent=5 // pred_check
        %p173 = pneg %p172
      $region14: #{tpu_custom_call.1} parent=5 // pred_check_branch
        %175 = sbr.rel (%p173) target = $region16
      $region15: #{tpu_custom_call.1} parent=5 // pred_region
        // Predicated region
        $region17: #{tpu_custom_call.1} parent=15 // pred_check
          %p176 = pneg %p65
        $region18: #{tpu_custom_call.1} parent=15 // pred_check_branch
          %178 = sbr.rel (%p176) target = $region20
        $region19: #{tpu_custom_call.1} parent=15 // pred_region
          %s179 = sand.u32 %s55, 1
          %s180 = scalar_lea.sflag [#allocation3], %s179
          %s181 = sand.u32 %s55, 1
          %s182 = smul.addr %s181, 8
          %s183 = scalar_lea.vmem [#allocation2], %s182
          %s184 = sadd.s32 %s29, %s31
          %s186 = ssub.s32 128, 128
          %187 = vsyncadd %s180, %s186
          %s188 = sadd.s32 %s184, %s30
          %s189 = smul.addr %s188, 128
          %s190 = scalar_lea.hbm %s0, %s189
          %s192 = sshll.u32 %s183, 4
          %s193 = int_to_ptr.vmem [resolvable:$true] %s192
          %195 = dma.hbm_to_vmem [thread:$0]  %s190, 128, %s193, %s180
        $region20: #{tpu_custom_call.1} parent=15 // pred_fallthru
          _
        // Predicated region
        $region21: #{tpu_custom_call.1} parent=15 // pred_check
          %p196 = pneg %p95
        $region22: #{tpu_custom_call.1} parent=15 // pred_check_branch
          %198 = sbr.rel (%p196) target = $region24
        $region23: #{tpu_custom_call.1} parent=15 // pred_region
          %s199 = sand.u32 %s85, 1
          %s200 = scalar_lea.sflag [#allocation6], %s199
          %s201 = sand.u32 %s85, 1
          %s202 = smul.addr %s201, 8
          %s203 = scalar_lea.vmem [#allocation5], %s202
          %s204 = sadd.s32 %s29, %s31
          %s206 = ssub.s32 128, 128
          %207 = vsyncadd %s200, %s206
          %s208 = sadd.s32 %s204, %s30
          %s209 = smul.addr %s208, 128
          %s210 = scalar_lea.hbm %s1, %s209
          %s212 = sshll.u32 %s203, 4
          %s213 = int_to_ptr.vmem [resolvable:$true] %s212
          %215 = dma.hbm_to_vmem [thread:$0]  %s210, 128, %s213, %s200
        $region24: #{tpu_custom_call.1} parent=15 // pred_fallthru
          _
      $region16: #{tpu_custom_call.1} parent=5 // pred_fallthru
        _
      %p216 = scmp.le.s32.totalorder 1, %s22
      %p217 = scmp.lt.s32.totalorder %s22, 3
      %p218 = pnand %p216, %p217
      %p219 = pneg %p218
      // Predicated region
      $region25: #{tpu_custom_call.1} parent=5 // pred_check
        _
      $region26: #{tpu_custom_call.1} parent=5 // pred_check_branch
        %221 = sbr.rel (%p218) target = $region28
      $region27: #{tpu_custom_call.1} parent=5 // pred_region
        %s222 = ssub.s32 %s22, 1
        %s223 = sand.u32 %s58, 1
        %s224 = scalar_lea.sflag [#allocation3], %s223
        %s225 = sand.u32 %s58, 1
        %s226 = smul.addr %s225, 8
        %s227 = scalar_lea.vmem [#allocation2], %s226
        // Predicated region
        $region29: #{tpu_custom_call.1} parent=27 // pred_check
          %p228 = pneg %p71
        $region30: #{tpu_custom_call.1} parent=27 // pred_check_branch
          %230 = sbr.rel (%p228) target = $region32
        $region31: #{tpu_custom_call.1} parent=27 // pred_region
          %231 = dma.done %s224, 128
        $region32: #{tpu_custom_call.1} parent=27 // pred_fallthru
          _
        %s232 = sand.u32 %s88, 1
        %s233 = scalar_lea.sflag [#allocation6], %s232
        %s234 = sand.u32 %s88, 1
        %s235 = smul.addr %s234, 8
        %s236 = scalar_lea.vmem [#allocation5], %s235
        // Predicated region
        $region33: #{tpu_custom_call.1} parent=27 // pred_check
          %p237 = pneg %p101
        $region34: #{tpu_custom_call.1} parent=27 // pred_check_branch
          %239 = sbr.rel (%p237) target = $region36
        $region35: #{tpu_custom_call.1} parent=27 // pred_region
          %240 = dma.done %s233, 128
        $region36: #{tpu_custom_call.1} parent=27 // pred_fallthru
          _
        %s241 = sand.u32 %s58, 1
        %s242 = scalar_lea.sflag [#allocation3], %s241
        %s243 = sand.u32 %s58, 1
        %s244 = smul.addr %s243, 8
        %s245 = scalar_lea.vmem [#allocation2], %s244
        %p246 = pneg %p71
        %p247 = pneg %p68
        %s248 = sand.u32 %s88, 1
        %s249 = scalar_lea.sflag [#allocation6], %s248
        %s250 = sand.u32 %s88, 1
        %s251 = smul.addr %s250, 8
        %s252 = scalar_lea.vmem [#allocation5], %s251
        %p253 = pneg %p101
        %p254 = pneg %p98
        %p255 = pneg %p129
        %p256 = pneg %p126
        %s257 = sand.u32 %s116, 1
        %s258 = scalar_lea.sflag [#allocation4], %s257
        %s259 = sand.u32 %s116, 1
        %s260 = smul.addr %s259, 8
        %s261 = scalar_lea.vmem [#allocation7], %s260
        %p262 = pneg %p157
        %p263 = pneg %p154
        %s264 = sand.u32 %s144, 1
        %s265 = scalar_lea.sflag [#allocation9], %s264
        %s266 = sand.u32 %s144, 1
        %s267 = smul.addr %s266, 8
        %s268 = scalar_lea.vmem [#allocation8], %s267
        %s269 = sadd.s32 %s32, %s34
        %s270 = sadd.s32 %s32, %s34
        %p271 = scmp.eq.s32.totalorder %s34, 0
        // Predicated region
        $region37: #{tpu_custom_call.1} parent=27 // pred_check
          %p272 = pneg %p271
        $region38: #{tpu_custom_call.1} parent=27 // pred_check_branch
          %274 = sbr.rel (%p272) target = $region40
        $region39: #{tpu_custom_call.1} parent=27 // pred_region
          %275 = vst [vmem:[%s261] sm:$0xff] 0.0
          %276 = vst [vmem:[%s268] sm:$0xff] 0.0
        $region40: #{tpu_custom_call.1} parent=27 // pred_fallthru
          _
        %v277 = vld [vmem:[%s227] sm:$0xff]
        %v278 = vld [vmem:[%s236] sm:$0xff]
        %v279 = vld [vmem:[%s261] sm:$0xff]
        %v280 = vmul.f32 %v277, %v278
        %v281 = vadd.f32 %v280, 0.0
        %v282 = vadd.f32 %v279, %v281
        %283 = vst [vmem:[%s261] sm:$0xff] %v282
        %v284 = vld [vmem:[%s268] sm:$0xff]
        %v285 = vadd.f32 %v277, %v278
        %v286 = vadd.f32 %v285, 0.0
        %v287 = vadd.f32 %v284, %v286
        %288 = vst [vmem:[%s268] sm:$0xff] %v287
        %s289 = sand.u32 %s116, 1
        %s290 = scalar_lea.sflag [#allocation4], %s289
        %s291 = sand.u32 %s116, 1
        %s292 = smul.addr %s291, 8
        %s293 = scalar_lea.vmem [#allocation7], %s292
        %s294 = sand.u32 %s144, 1
        %s295 = scalar_lea.sflag [#allocation9], %s294
        %s296 = sand.u32 %s144, 1
        %s297 = smul.addr %s296, 8
        %s298 = scalar_lea.vmem [#allocation8], %s297
        // Predicated region
        $region41: #{tpu_custom_call.1} parent=27 // pred_check
          %p299 = pneg %p126
        $region42: #{tpu_custom_call.1} parent=27 // pred_check_branch
          %301 = sbr.rel (%p299) target = $region44
        $region43: #{tpu_custom_call.1} parent=27 // pred_region
          %s303 = ssub.s32 128, 128
          %304 = vsyncadd %s290, %s303
          %s305 = smul.addr %s32, 2
          %s306 = sadd.s32 %s33, %s305
          %s307 = smul.addr %s306, 128
          %s308 = scalar_lea.hbm %s2, %s307
          %s310 = sshll.u32 %s293, 4
          %s311 = int_to_ptr.vmem [resolvable:$true] %s310
          %313 = dma.vmem_to_hbm [thread:$0]  %s311, 128, %s308, %s290
        $region44: #{tpu_custom_call.1} parent=27 // pred_fallthru
          _
        // Predicated region
        $region45: #{tpu_custom_call.1} parent=27 // pred_check
          %p314 = pneg %p154
        $region46: #{tpu_custom_call.1} parent=27 // pred_check_branch
          %316 = sbr.rel (%p314) target = $region48
        $region47: #{tpu_custom_call.1} parent=27 // pred_region
          %s318 = ssub.s32 128, 128
          %319 = vsyncadd %s295, %s318
          %s320 = smul.addr %s32, 2
          %s321 = sadd.s32 %s33, %s320
          %s322 = smul.addr %s321, 128
          %s323 = scalar_lea.hbm %s3, %s322
          %s325 = sshll.u32 %s298, 4
          %s326 = int_to_ptr.vmem [resolvable:$true] %s325
          %328 = dma.vmem_to_hbm [thread:$0]  %s326, 128, %s323, %s295
        $region48: #{tpu_custom_call.1} parent=27 // pred_fallthru
          _
      $region28: #{tpu_custom_call.1} parent=5 // pred_fallthru
        _
      %p329 = scmp.le.s32.totalorder 2, %s22
      // Predicated region
      $region49: #{tpu_custom_call.1} parent=5 // pred_check
        %p330 = pneg %p329
      $region50: #{tpu_custom_call.1} parent=5 // pred_check_branch
        %332 = sbr.rel (%p330) target = $region52
      $region51: #{tpu_custom_call.1} parent=5 // pred_region
        %s333 = ssub.s32 %s22, 2
        // Predicated region
        $region53: #{tpu_custom_call.1} parent=51 // pred_check
          %p334 = pneg %p132
        $region54: #{tpu_custom_call.1} parent=51 // pred_check_branch
          %336 = sbr.rel (%p334) target = $region56
        $region55: #{tpu_custom_call.1} parent=51 // pred_region
          %s337 = sand.u32 %s117, 1
          %s338 = scalar_lea.sflag [#allocation4], %s337
          %s339 = sand.u32 %s117, 1
          %s340 = smul.addr %s339, 8
          %s341 = scalar_lea.vmem [#allocation7], %s340
          %342 = dma.done %s338, 128
        $region56: #{tpu_custom_call.1} parent=51 // pred_fallthru
          _
        // Predicated region
        $region57: #{tpu_custom_call.1} parent=51 // pred_check
          %p343 = pneg %p160
        $region58: #{tpu_custom_call.1} parent=51 // pred_check_branch
          %345 = sbr.rel (%p343) target = $region60
        $region59: #{tpu_custom_call.1} parent=51 // pred_region
          %s346 = sand.u32 %s145, 1
          %s347 = scalar_lea.sflag [#allocation9], %s346
          %s348 = sand.u32 %s145, 1
          %s349 = smul.addr %s348, 8
          %s350 = scalar_lea.vmem [#allocation8], %s349
          %351 = dma.done %s347, 128
        $region60: #{tpu_custom_call.1} parent=51 // pred_fallthru
          _
      $region52: #{tpu_custom_call.1} parent=5 // pred_fallthru
        _
    $region6: #{tpu_custom_call.1} parent=1 // loop_footer
      %s26 = sadd.s32 1, %s22
    $region7: #{tpu_custom_call.1} parent=1 // loop_footer_branch
      %21 = sbr.rel target = $region3
    $region8: #{tpu_custom_call.1} parent=1 // loop_exit
      _
    %352 = vsyncpa [#allocation3], 1
    %s353 = scalar_lea.sflag [#allocation3], 1
    %354 = vsyncpa %s353, 1
    %355 = vsyncpa [#allocation6], 1
    %s356 = scalar_lea.sflag [#allocation6], 1
    %357 = vsyncpa %s356, 1
    %358 = vsyncpa [#allocation4], 1
    %s359 = scalar_lea.sflag [#allocation4], 1
    %360 = vsyncpa %s359, 1
    %361 = vsyncpa [#allocation9], 1
    %s362 = scalar_lea.sflag [#allocation9], 1
    %363 = vsyncpa %s362, 1

</llo_original>
